<compile_context>
chip_gen: v6e
topology: v6e:2x2x1
jax: 0.10.0
libtpu: 0.0.40
codegen_flags: <defaults>
</compile_context>

<pallas_src>
import jax
import jax.numpy as jnp
from jax.experimental import pallas as pl
from jax.experimental.pallas import tpu as pltpu

_H1, _H2 = 20, 10  # hidden widths of the SAE


def _round_up(v, m):
    return ((v + m - 1) // m) * m


def sae_kernel(x_ref,
               w1_ref, b1_ref,
               w2_ref, b2_ref,
               w3_ref, b3_ref,
               w4_ref, b4_ref,
               o_ref):
    # Streamed I/O may be bf16; all math is f32 (MXU accumulates in f32).
    x = x_ref[...].astype(jnp.float32)

    h = jax.nn.sigmoid(
        jnp.dot(x, w1_ref[...], preferred_element_type=jnp.float32) + b1_ref[...])
    h = jax.nn.sigmoid(
        jnp.dot(h, w2_ref[...], preferred_element_type=jnp.float32) + b2_ref[...])
    h = jax.nn.sigmoid(
        jnp.dot(h, w3_ref[...], preferred_element_type=jnp.float32) + b3_ref[...])
    out = (jnp.dot(h, w4_ref[...], preferred_element_type=jnp.float32)
           + b4_ref[...])
    o_ref[...] = out.astype(o_ref.dtype)


def _vmem_budgets():
    """(streamed-tile budget, vmem_limit cap) in bytes, per TPU generation."""
    try:
        cap = int(pltpu.get_tpu_info().vmem_capacity_bytes)
    except Exception:
        cap = 64 * 1024 * 1024  # assume the smallest (v7x per-TC) if unknown
    if cap <= 64 * 1024 * 1024:          # v7x: 64 MiB physical per TC
        return 36 * 1024 * 1024, 48 * 1024 * 1024
    return 88 * 1024 * 1024, 100 * 1024 * 1024   # v5e / v6e: 128 MiB VMEM


def _choose_bm(batch, m, in_itemsize, out_itemsize, nbuf_in, budget, sub):
    """Batch tile: ~4 grid steps (even count), capped by the streamed-VMEM budget."""
    if batch <= sub:
        return batch                       # single full-dim block

    target_steps = 4                       # steady-state pipeline + 2 steps/TC on v7x
    bm = min(1024, max(sub, _round_up(pl.cdiv(batch, target_steps), sub)))
    bm = min(bm, _round_up(batch, sub))

    def footprint(b):
        stream = (nbuf_in * in_itemsize + 2 * out_itemsize) * b * m
        interm = 3 * b * m * 4             # f32 in-kernel row intermediates
        return stream + interm

    while bm > sub and footprint(bm) > budget:
        bm = max(sub, _round_up(bm // 2, sub))

    # v7x: 2 TensorCores share the "parallel" batch axis -> prefer an even
    # number of grid steps so neither core sits idle / un-pipelined.
    steps = pl.cdiv(batch, bm)
    if steps > 2 and steps % 2 == 1:
        bm_alt = max(sub, _round_up(pl.cdiv(batch, steps + 1), sub))
        if pl.cdiv(batch, bm_alt) % 2 == 0 and footprint(bm_alt) <= budget:
            bm = bm_alt
    return bm


def _streamed_spec(block_shape, index_map, buffers):
    # Optional deeper pipelining for the streamed x tile only (never for the
    # resident weights, never for the output).  Falls back cleanly on jax
    # versions without pipeline_mode support.
    if buffers and buffers > 2 and hasattr(pl, "Buffered"):
        try:
            return pl.BlockSpec(block_shape, index_map,
                                pipeline_mode=pl.Buffered(buffers))
        except TypeError:
            pass
    return pl.BlockSpec(block_shape, index_map)


def sae_forward(x, params, *, bm=None, stream_buffers=2,
                io_dtype=jnp.bfloat16, interpret=False):
    """x: (B, M); params: w{i}: (in, out), b{i}: (1, out).  Returns (B, M) io_dtype."""
    B, M = x.shape
    io_dtype = jnp.dtype(io_dtype)
    f32 = jnp.float32

    # Stream the big (B, M) slabs in io_dtype (bf16 by default); no padding,
    # no post-slice.  Callers should supply x already in io_dtype to avoid the
    # extra convert; the cast below is a no-op in that case.
    if x.dtype != io_dtype:
        x = x.astype(io_dtype)

    # Weights / biases stay f32 (tiny; resident in VMEM for the whole grid).
    w1 = params["w1"].astype(f32)
    b1 = params["b1"].astype(f32)
    w2 = params["w2"].astype(f32)
    b2 = params["b2"].astype(f32)
    w3 = params["w3"].astype(f32)
    b3 = params["b3"].astype(f32)
    w4 = params["w4"].astype(f32)
    b4 = params["b4"].astype(f32)

    nbuf_in = max(2, int(stream_buffers))
    budget, limit_cap = _vmem_budgets()
    # Sub-lane granularity of the batch-tile (bf16 packs 16 rows / vreg).
    sub = 16 if io_dtype.itemsize < 4 else 8

    if bm is None:
        bm = _choose_bm(B, M, io_dtype.itemsize, io_dtype.itemsize,
                        nbuf_in, budget, sub)
    bm = min(bm, B) if B <= sub else max(sub, _round_up(min(bm, B), sub))

    grid = (pl.cdiv(B, bm),)

    def resident_spec(shape):
        # Constant index_map -> block stays resident in VMEM across all steps.
        return pl.BlockSpec(shape, lambda i: (0,) * len(shape))

    # Explicit VMEM budget: streamed x/out buffers + resident (double-buffered)
    # weights + in-kernel f32 intermediates, with margin.
    stream_bytes = (nbuf_in + 2) * bm * M * io_dtype.itemsize
    weight_bytes = 2 * 4 * (M * _H1 + _H1 + _H1 * _H2 + _H2
                            + _H2 * _H1 + _H1 + _H1 * M + M)
    interm_bytes = 3 * bm * M * 4
    vmem_limit = int(1.3 * (stream_bytes + weight_bytes + interm_bytes)) + (2 << 20)
    vmem_limit = min(max(vmem_limit, 32 * 1024 * 1024), limit_cap)

    out = pl.pallas_call(
        sae_kernel,
        out_shape=jax.ShapeDtypeStruct((B, M), io_dtype),
        grid_spec=pltpu.PrefetchScalarGridSpec(
            num_scalar_prefetch=0,
            grid=grid,
            in_specs=[
                _streamed_spec((bm, M), lambda i: (i, 0), nbuf_in),
                resident_spec(w1.shape), resident_spec(b1.shape),
                resident_spec(w2.shape), resident_spec(b2.shape),
                resident_spec(w3.shape), resident_spec(b3.shape),
                resident_spec(w4.shape), resident_spec(b4.shape),
            ],
            out_specs=pl.BlockSpec((bm, M), lambda i: (i, 0)),
        ),
        compiler_params=pltpu.CompilerParams(
            dimension_semantics=("parallel",),
            vmem_limit_bytes=vmem_limit),
        interpret=interpret,
    )(x, w1, b1, w2, b2, w3, b3, w4, b4)

    return out


def init_params(key, number_of_movies):
    """Deterministic init mimicking nn.Linear (stored transposed: (in, out))."""
    dims = [(number_of_movies, _H1), (_H1, _H2), (_H2, _H1),
            (_H1, number_of_movies)]
    params = {}
    for idx, (fan_in, fan_out) in enumerate(dims, start=1):
        key, kw, kb = jax.random.split(key, 3)
        bound = 1.0 / jnp.sqrt(jnp.float32(fan_in))
        params[f"w{idx}"] = jax.random.uniform(
            kw, (fan_in, fan_out), jnp.float32, -bound, bound)
        params[f"b{idx}"] = jax.random.uniform(
            kb, (1, fan_out), jnp.float32, -bound, bound)
    return params


def sae_reference(x, params):
    h = jax.nn.sigmoid(x @ params["w1"] + params["b1"])
    h = jax.nn.sigmoid(h @ params["w2"] + params["b2"])
    h = jax.nn.sigmoid(h @ params["w3"] + params["b3"])
    return h @ params["w4"] + params["b4"]


if __name__ == "__main__":
    # Small MovieLens-flavored shapes; number_of_movies deliberately NOT a
    # multiple of 128 (exercises the unpadded, full-width block path) and a
    # batch that yields an even, 4-step "parallel" grid.
    number_of_movies = 200
    batch = 64

    key = jax.random.PRNGKey(0)
    key, kx = jax.random.split(key)
    # ratings-like input in [0, 5]
    x = jax.random.uniform(kx, (batch, number_of_movies), jnp.float32, 0.0, 5.0)
    params = init_params(key, number_of_movies)

    out = jax.block_until_ready(sae_forward(x, params))
    assert out.shape == (batch, number_of_movies)

    # Reference on the same bf16-rounded input; kernel output is bf16 I/O with
    # f32 accumulation, so compare with bf16-level tolerance.
    x_io = x.astype(jnp.bfloat16).astype(jnp.float32)
    ref = sae_reference(x_io, params)
    err = float(jnp.max(jnp.abs(out.astype(jnp.float32) - ref)))
    assert err < 3e-2, f"mismatch vs JAX reference: max abs err {err}"

    print("KERNEL_OK")
</pallas_src>

<mosaic_0001>
module attributes {stable_mosaic.version = 11 : i64} {
  func.func @sae_kernel(%arg0: i32, %arg1: memref<16x200xbf16, #tpu.memory_space<vmem>>, %arg2: memref<200x20xf32, #tpu.memory_space<vmem>>, %arg3: memref<1x20xf32, #tpu.memory_space<vmem>>, %arg4: memref<20x10xf32, #tpu.memory_space<vmem>>, %arg5: memref<1x10xf32, #tpu.memory_space<vmem>>, %arg6: memref<10x20xf32, #tpu.memory_space<vmem>>, %arg7: memref<1x20xf32, #tpu.memory_space<vmem>>, %arg8: memref<20x200xf32, #tpu.memory_space<vmem>>, %arg9: memref<1x200xf32, #tpu.memory_space<vmem>>, %arg10: memref<16x200xbf16, #tpu.memory_space<vmem>>) attributes {dimension_semantics = [#tpu.dimension_semantics<parallel>], iteration_bounds = array<i64: 4>, scalar_prefetch = 0 : i64, scratch_operands = 0 : i64, tpu.core_type = #tpu.core_type<tc>, window_params = [{transform_indices = @transform_0, window_bounds = array<i64: 16, 200>}, {pipeline_mode = #tpu.pipeline_mode<synchronous>, transform_indices = @transform_1, window_bounds = array<i64: 200, 20>}, {pipeline_mode = #tpu.pipeline_mode<synchronous>, transform_indices = @transform_2, window_bounds = array<i64: 1, 20>}, {pipeline_mode = #tpu.pipeline_mode<synchronous>, transform_indices = @transform_3, window_bounds = array<i64: 20, 10>}, {pipeline_mode = #tpu.pipeline_mode<synchronous>, transform_indices = @transform_4, window_bounds = array<i64: 1, 10>}, {pipeline_mode = #tpu.pipeline_mode<synchronous>, transform_indices = @transform_5, window_bounds = array<i64: 10, 20>}, {pipeline_mode = #tpu.pipeline_mode<synchronous>, transform_indices = @transform_6, window_bounds = array<i64: 1, 20>}, {pipeline_mode = #tpu.pipeline_mode<synchronous>, transform_indices = @transform_7, window_bounds = array<i64: 20, 200>}, {pipeline_mode = #tpu.pipeline_mode<synchronous>, transform_indices = @transform_8, window_bounds = array<i64: 1, 200>}, {transform_indices = @transform_9, window_bounds = array<i64: 16, 200>}]} {
    %c0 = arith.constant 0 : index
    %c0_0 = arith.constant 0 : index
    %0 = vector.load %arg1[%c0, %c0_0] : memref<16x200xbf16, #tpu.memory_space<vmem>>, vector<16x200xbf16>
    %1 = arith.extf %0 : vector<16x200xbf16> to vector<16x200xf32>
    %c0_1 = arith.constant 0 : index
    %c0_2 = arith.constant 0 : index
    %2 = vector.load %arg2[%c0_1, %c0_2] : memref<200x20xf32, #tpu.memory_space<vmem>>, vector<200x20xf32>
    %cst = arith.constant dense<0.000000e+00> : vector<16x20xf32>
    %3 = tpu.matmul %1, %2, %cst {dimension_numbers = #tpu.dot_dimension_numbers<[1], [0], [0], [1], [0, 0, 1, 1], [], []>} : vector<16x200xf32>, vector<200x20xf32>, vector<16x20xf32> -> vector<16x20xf32>
    %c0_3 = arith.constant 0 : index
    %c0_4 = arith.constant 0 : index
    %4 = vector.load %arg3[%c0_3, %c0_4] : memref<1x20xf32, #tpu.memory_space<vmem>>, vector<1x20xf32>
    %5 = vector.broadcast %4 : vector<1x20xf32> to vector<16x20xf32>
    %6 = arith.addf %3, %5 : vector<16x20xf32>
    %7 = arith.negf %6 : vector<16x20xf32>
    %8 = math.exp %7 : vector<16x20xf32>
    %cst_5 = arith.constant 1.000000e+00 : f32
    %9 = vector.broadcast %cst_5 : f32 to vector<16x20xf32>
    %10 = arith.addf %9, %8 : vector<16x20xf32>
    %11 = arith.divf %9, %10 : vector<16x20xf32>
    %c0_6 = arith.constant 0 : index
    %c0_7 = arith.constant 0 : index
    %12 = vector.load %arg4[%c0_6, %c0_7] : memref<20x10xf32, #tpu.memory_space<vmem>>, vector<20x10xf32>
    %cst_8 = arith.constant dense<0.000000e+00> : vector<16x10xf32>
    %13 = tpu.matmul %11, %12, %cst_8 {dimension_numbers = #tpu.dot_dimension_numbers<[1], [0], [0], [1], [0, 0, 1, 1], [], []>} : vector<16x20xf32>, vector<20x10xf32>, vector<16x10xf32> -> vector<16x10xf32>
    %c0_9 = arith.constant 0 : index
    %c0_10 = arith.constant 0 : index
    %14 = vector.load %arg5[%c0_9, %c0_10] : memref<1x10xf32, #tpu.memory_space<vmem>>, vector<1x10xf32>
    %15 = vector.broadcast %14 : vector<1x10xf32> to vector<16x10xf32>
    %16 = arith.addf %13, %15 : vector<16x10xf32>
    %17 = arith.negf %16 : vector<16x10xf32>
    %18 = math.exp %17 : vector<16x10xf32>
    %cst_11 = arith.constant 1.000000e+00 : f32
    %19 = vector.broadcast %cst_11 : f32 to vector<16x10xf32>
    %20 = arith.addf %19, %18 : vector<16x10xf32>
    %21 = arith.divf %19, %20 : vector<16x10xf32>
    %c0_12 = arith.constant 0 : index
    %c0_13 = arith.constant 0 : index
    %22 = vector.load %arg6[%c0_12, %c0_13] : memref<10x20xf32, #tpu.memory_space<vmem>>, vector<10x20xf32>
    %cst_14 = arith.constant dense<0.000000e+00> : vector<16x20xf32>
    %23 = tpu.matmul %21, %22, %cst_14 {dimension_numbers = #tpu.dot_dimension_numbers<[1], [0], [0], [1], [0, 0, 1, 1], [], []>} : vector<16x10xf32>, vector<10x20xf32>, vector<16x20xf32> -> vector<16x20xf32>
    %c0_15 = arith.constant 0 : index
    %c0_16 = arith.constant 0 : index
    %24 = vector.load %arg7[%c0_15, %c0_16] : memref<1x20xf32, #tpu.memory_space<vmem>>, vector<1x20xf32>
    %25 = vector.broadcast %24 : vector<1x20xf32> to vector<16x20xf32>
    %26 = arith.addf %23, %25 : vector<16x20xf32>
    %27 = arith.negf %26 : vector<16x20xf32>
    %28 = math.exp %27 : vector<16x20xf32>
    %cst_17 = arith.constant 1.000000e+00 : f32
    %29 = vector.broadcast %cst_17 : f32 to vector<16x20xf32>
    %30 = arith.addf %29, %28 : vector<16x20xf32>
    %31 = arith.divf %29, %30 : vector<16x20xf32>
    %c0_18 = arith.constant 0 : index
    %c0_19 = arith.constant 0 : index
    %32 = vector.load %arg8[%c0_18, %c0_19] : memref<20x200xf32, #tpu.memory_space<vmem>>, vector<20x200xf32>
    %cst_20 = arith.constant dense<0.000000e+00> : vector<16x200xf32>
    %33 = tpu.matmul %31, %32, %cst_20 {dimension_numbers = #tpu.dot_dimension_numbers<[1], [0], [0], [1], [0, 0, 1, 1], [], []>} : vector<16x20xf32>, vector<20x200xf32>, vector<16x200xf32> -> vector<16x200xf32>
    %c0_21 = arith.constant 0 : index
    %c0_22 = arith.constant 0 : index
    %34 = vector.load %arg9[%c0_21, %c0_22] : memref<1x200xf32, #tpu.memory_space<vmem>>, vector<1x200xf32>
    %35 = vector.broadcast %34 : vector<1x200xf32> to vector<16x200xf32>
    %36 = arith.addf %33, %35 : vector<16x200xf32>
    %37 = arith.truncf %36 : vector<16x200xf32> to vector<16x200xbf16>
    %c0_23 = arith.constant 0 : index
    %c0_24 = arith.constant 0 : index
    %38 = vector.load %arg10[%c0_23, %c0_24] : memref<16x200xbf16, #tpu.memory_space<vmem>>, vector<16x200xbf16>
    tpu.vector_store %arg10[%c0_23, %c0_24], %37 {strides = array<i32>} : memref<16x200xbf16, #tpu.memory_space<vmem>>, vector<16x200xbf16>,
    return
  }
  func.func @transform_0(%arg0: i32) -> (i32, i32) {
    %c0_i32 = arith.constant 0 : i32
    %c0_i32_0 = arith.constant 0 : i32
    return %arg0, %c0_i32 : i32, i32
  }
  func.func @transform_1(%arg0: i32) -> (i32, i32) {
    %c0_i32 = arith.constant 0 : i32
    %c0_i32_0 = arith.constant 0 : i32
    %c0_i32_1 = arith.constant 0 : i32
    return %c0_i32, %c0_i32_0 : i32, i32
  }
  func.func @transform_2(%arg0: i32) -> (i32, i32) {
    %c0_i32 = arith.constant 0 : i32
    %c0_i32_0 = arith.constant 0 : i32
    %c0_i32_1 = arith.constant 0 : i32
    return %c0_i32, %c0_i32_0 : i32, i32
  }
  func.func @transform_3(%arg0: i32) -> (i32, i32) {
    %c0_i32 = arith.constant 0 : i32
    %c0_i32_0 = arith.constant 0 : i32
    %c0_i32_1 = arith.constant 0 : i32
    return %c0_i32, %c0_i32_0 : i32, i32
  }
  func.func @transform_4(%arg0: i32) -> (i32, i32) {
    %c0_i32 = arith.constant 0 : i32
    %c0_i32_0 = arith.constant 0 : i32
    %c0_i32_1 = arith.constant 0 : i32
    return %c0_i32, %c0_i32_0 : i32, i32
  }
  func.func @transform_5(%arg0: i32) -> (i32, i32) {
    %c0_i32 = arith.constant 0 : i32
    %c0_i32_0 = arith.constant 0 : i32
    %c0_i32_1 = arith.constant 0 : i32
    return %c0_i32, %c0_i32_0 : i32, i32
  }
  func.func @transform_6(%arg0: i32) -> (i32, i32) {
    %c0_i32 = arith.constant 0 : i32
    %c0_i32_0 = arith.constant 0 : i32
    %c0_i32_1 = arith.constant 0 : i32
    return %c0_i32, %c0_i32_0 : i32, i32
  }
  func.func @transform_7(%arg0: i32) -> (i32, i32) {
    %c0_i32 = arith.constant 0 : i32
    %c0_i32_0 = arith.constant 0 : i32
    %c0_i32_1 = arith.constant 0 : i32
    return %c0_i32, %c0_i32_0 : i32, i32
  }
  func.func @transform_8(%arg0: i32) -> (i32, i32) {
    %c0_i32 = arith.constant 0 : i32
    %c0_i32_0 = arith.constant 0 : i32
    %c0_i32_1 = arith.constant 0 : i32
    return %c0_i32, %c0_i32_0 : i32, i32
  }
  func.func @transform_9(%arg0: i32) -> (i32, i32) {
    %c0_i32 = arith.constant 0 : i32
    %c0_i32_0 = arith.constant 0 : i32
    return %arg0, %c0_i32 : i32, i32
  }
}

</mosaic_0001>

<llo_original>
// kernel: tpu_custom_call.1
$region0: #{tpu_custom_call.1}
  #allocation0 [shape = 'u32[]', space=smem, size = 0x4, offset = 0x4, fixed_abs, tag = 'smem constant byte address 0x4 - core index']
  #allocation1 [shape = 'u32[144,128]{1,0:T(1,128)}', space=vmem, size = 0x12000, scoped, tag = 'internal scratch']
  %s0 = inlined_call_operand.vmem [shape: bf16[64,200], index: 0, kind: input, shape index: {}]
  %s1 = inlined_call_operand.vmem [shape: f32[200,20], index: 1, kind: input, shape index: {}]
  %s2 = inlined_call_operand.vmem [shape: f32[1,20], index: 2, kind: input, shape index: {}]
  %s3 = inlined_call_operand.vmem [shape: f32[20,10], index: 3, kind: input, shape index: {}]
  %s4 = inlined_call_operand.vmem [shape: f32[1,10], index: 4, kind: input, shape index: {}]
  %s5 = inlined_call_operand.vmem [shape: f32[10,20], index: 5, kind: input, shape index: {}]
  %s6 = inlined_call_operand.vmem [shape: f32[1,20], index: 6, kind: input, shape index: {}]
  %s7 = inlined_call_operand.vmem [shape: f32[20,200], index: 7, kind: input, shape index: {}]
  %s8 = inlined_call_operand.vmem [shape: f32[1,200], index: 8, kind: input, shape index: {}]
  %s9 = inlined_call_operand.hbm [shape: bf16[64,200], index: 9, kind: output, shape index: {}]
  %s10 = sld [smem:[#allocation0]]
  $region69: #{tpu_custom_call.1} parent=0
    _
  %s12 = ssub.s32 1, %s10
  %s13 = scalar_select 0, %s12, %s10
  $region1: #{tpu_custom_call.1} parent=0
    #allocation2 [shape = 'u8[16384]{0}', space=vmem, size = 0x4000, scoped, tag = 'output window, operand 0']
    #allocation3 [shape = 's32[2]{0}', space=sflag, size = 0x8, scoped, tag = 'scoped memory for tpu_custom_call.1']
    %14 = vsyncpa [#allocation3], 0
    %s15 = scalar_lea.sflag [#allocation3], 1
    %16 = vsyncpa %s15, 0
    loop: start=0, step=1, limit=6
    $region2: #{tpu_custom_call.1} parent=1 // loop_pre_header
      _
    $region3: #{tpu_custom_call.1} parent=1 // loop_header
      %s18 = sphi 0, %s22
      %p19 = scmp.ge.s32.totalorder %s18, 6
      %s28 = sphi 0, %s30
      %s31 = sphi 0, %s28
      %s32 = sphi 0, %s31
      %s48 = sphi 0, %s32
      %s52 = sphi 0, %s52
      %s54 = sphi 0, %s52
      %s55 = sphi 0, %s54
      %s69 = sphi 0, %s55
      %s73 = sphi 0, %s73
      %s75 = sphi 0, %s73
      %s76 = sphi 0, %s75
      %s90 = sphi 0, %s76
      %s94 = sphi 0, %s94
      %s96 = sphi 0, %s94
      %s97 = sphi 0, %s96
      %s111 = sphi 0, %s97
      %s115 = sphi 0, %s115
      %s117 = sphi 0, %s115
      %s118 = sphi 0, %s117
      %s132 = sphi 0, %s118
      %s136 = sphi 0, %s136
      %s138 = sphi 0, %s136
      %s139 = sphi 0, %s138
      %s153 = sphi 0, %s139
      %s157 = sphi 0, %s157
      %s159 = sphi 0, %s157
      %s160 = sphi 0, %s159
      %s174 = sphi 0, %s160
      %s178 = sphi 0, %s178
      %s180 = sphi 0, %s178
      %s181 = sphi 0, %s180
      %s195 = sphi 0, %s181
      %s199 = sphi 0, %s199
      %s201 = sphi 0, %s199
      %s202 = sphi 0, %s201
      %s216 = sphi 0, %s202
      %s222 = sphi 0, %s224
      %s225 = sphi 0, %s222
      %s226 = sphi 0, %s225
      %s242 = sphi 0, %s226
    $region4: #{tpu_custom_call.1} parent=1 // loop_header_branch
      %21 = sbr.rel (%p19) target = $region8
    $region5: #{tpu_custom_call.1} parent=1 // loop_body
      %s23 = ssub.s32 %s18, 1
      %s24 = ssub.s32 %s18, 2
      %s25 = sadd.s32 %s18, 1
      %s26 = ssub.s32 %s18, %s25
      %p27 = scmp.eq.s32.totalorder %s26, 0
      %s29 = sadd.s32 %s28, 1
      %s30 = scalar_select %p27, %s28, %s29
      %p33 = pneg %p27
      %p34 = scmp.eq.s32.totalorder %s18, 3
      %p35 = por %p33, %p34
      %p36 = scmp.ne.s32.totalorder %s28, %s31
      %p37 = scmp.eq.s32.totalorder %s18, 0
      %p38 = por %p36, %p37
      %p39 = scmp.ne.s32.totalorder %s28, %s31
      %p40 = scmp.eq.s32.totalorder %s23, 3
      %p41 = por %p39, %p40
      %p42 = scmp.ne.s32.totalorder %s31, %s32
      %p43 = scmp.eq.s32.totalorder %s23, 0
      %p44 = por %p42, %p43
      %p45 = scmp.ne.s32.totalorder %s31, %s32
      %p46 = scmp.eq.s32.totalorder %s24, 3
      %p47 = por %p45, %p46
      %p49 = scmp.ne.s32.totalorder %s32, %s48
      %p50 = scmp.eq.s32.totalorder %s24, 0
      %p51 = por %p49, %p50
      %s53 = sadd.s32 %s52, 1
      %p56 = scmp.eq.s32.totalorder %s18, 3
      %p57 = scmp.ne.s32.totalorder %s52, %s54
      %p58 = scmp.eq.s32.totalorder %s18, 0
      %p59 = por %p57, %p58
      %p60 = scmp.ne.s32.totalorder %s52, %s54
      %p61 = scmp.eq.s32.totalorder %s23, 3
      %p62 = por %p60, %p61
      %p63 = scmp.ne.s32.totalorder %s54, %s55
      %p64 = scmp.eq.s32.totalorder %s23, 0
      %p65 = por %p63, %p64
      %p66 = scmp.ne.s32.totalorder %s54, %s55
      %p67 = scmp.eq.s32.totalorder %s24, 3
      %p68 = por %p66, %p67
      %p70 = scmp.ne.s32.totalorder %s55, %s69
      %p71 = scmp.eq.s32.totalorder %s24, 0
      %p72 = por %p70, %p71
      %s74 = sadd.s32 %s73, 1
      %p77 = scmp.eq.s32.totalorder %s18, 3
      %p78 = scmp.ne.s32.totalorder %s73, %s75
      %p79 = scmp.eq.s32.totalorder %s18, 0
      %p80 = por %p78, %p79
      %p81 = scmp.ne.s32.totalorder %s73, %s75
      %p82 = scmp.eq.s32.totalorder %s23, 3
      %p83 = por %p81, %p82
      %p84 = scmp.ne.s32.totalorder %s75, %s76
      %p85 = scmp.eq.s32.totalorder %s23, 0
      %p86 = por %p84, %p85
      %p87 = scmp.ne.s32.totalorder %s75, %s76
      %p88 = scmp.eq.s32.totalorder %s24, 3
      %p89 = por %p87, %p88
      %p91 = scmp.ne.s32.totalorder %s76, %s90
      %p92 = scmp.eq.s32.totalorder %s24, 0
      %p93 = por %p91, %p92
      %s95 = sadd.s32 %s94, 1
      %p98 = scmp.eq.s32.totalorder %s18, 3
      %p99 = scmp.ne.s32.totalorder %s94, %s96
      %p100 = scmp.eq.s32.totalorder %s18, 0
      %p101 = por %p99, %p100
      %p102 = scmp.ne.s32.totalorder %s94, %s96
      %p103 = scmp.eq.s32.totalorder %s23, 3
      %p104 = por %p102, %p103
      %p105 = scmp.ne.s32.totalorder %s96, %s97
      %p106 = scmp.eq.s32.totalorder %s23, 0
      %p107 = por %p105, %p106
      %p108 = scmp.ne.s32.totalorder %s96, %s97
      %p109 = scmp.eq.s32.totalorder %s24, 3
      %p110 = por %p108, %p109
      %p112 = scmp.ne.s32.totalorder %s97, %s111
      %p113 = scmp.eq.s32.totalorder %s24, 0
      %p114 = por %p112, %p113
      %s116 = sadd.s32 %s115, 1
      %p119 = scmp.eq.s32.totalorder %s18, 3
      %p120 = scmp.ne.s32.totalorder %s115, %s117
      %p121 = scmp.eq.s32.totalorder %s18, 0
      %p122 = por %p120, %p121
      %p123 = scmp.ne.s32.totalorder %s115, %s117
      %p124 = scmp.eq.s32.totalorder %s23, 3
      %p125 = por %p123, %p124
      %p126 = scmp.ne.s32.totalorder %s117, %s118
      %p127 = scmp.eq.s32.totalorder %s23, 0
      %p128 = por %p126, %p127
      %p129 = scmp.ne.s32.totalorder %s117, %s118
      %p130 = scmp.eq.s32.totalorder %s24, 3
      %p131 = por %p129, %p130
      %p133 = scmp.ne.s32.totalorder %s118, %s132
      %p134 = scmp.eq.s32.totalorder %s24, 0
      %p135 = por %p133, %p134
      %s137 = sadd.s32 %s136, 1
      %p140 = scmp.eq.s32.totalorder %s18, 3
      %p141 = scmp.ne.s32.totalorder %s136, %s138
      %p142 = scmp.eq.s32.totalorder %s18, 0
      %p143 = por %p141, %p142
      %p144 = scmp.ne.s32.totalorder %s136, %s138
      %p145 = scmp.eq.s32.totalorder %s23, 3
      %p146 = por %p144, %p145
      %p147 = scmp.ne.s32.totalorder %s138, %s139
      %p148 = scmp.eq.s32.totalorder %s23, 0
      %p149 = por %p147, %p148
      %p150 = scmp.ne.s32.totalorder %s138, %s139
      %p151 = scmp.eq.s32.totalorder %s24, 3
      %p152 = por %p150, %p151
      %p154 = scmp.ne.s32.totalorder %s139, %s153
      %p155 = scmp.eq.s32.totalorder %s24, 0
      %p156 = por %p154, %p155
      %s158 = sadd.s32 %s157, 1
      %p161 = scmp.eq.s32.totalorder %s18, 3
      %p162 = scmp.ne.s32.totalorder %s157, %s159
      %p163 = scmp.eq.s32.totalorder %s18, 0
      %p164 = por %p162, %p163
      %p165 = scmp.ne.s32.totalorder %s157, %s159
      %p166 = scmp.eq.s32.totalorder %s23, 3
      %p167 = por %p165, %p166
      %p168 = scmp.ne.s32.totalorder %s159, %s160
      %p169 = scmp.eq.s32.totalorder %s23, 0
      %p170 = por %p168, %p169
      %p171 = scmp.ne.s32.totalorder %s159, %s160
      %p172 = scmp.eq.s32.totalorder %s24, 3
      %p173 = por %p171, %p172
      %p175 = scmp.ne.s32.totalorder %s160, %s174
      %p176 = scmp.eq.s32.totalorder %s24, 0
      %p177 = por %p175, %p176
      %s179 = sadd.s32 %s178, 1
      %p182 = scmp.eq.s32.totalorder %s18, 3
      %p183 = scmp.ne.s32.totalorder %s178, %s180
      %p184 = scmp.eq.s32.totalorder %s18, 0
      %p185 = por %p183, %p184
      %p186 = scmp.ne.s32.totalorder %s178, %s180
      %p187 = scmp.eq.s32.totalorder %s23, 3
      %p188 = por %p186, %p187
      %p189 = scmp.ne.s32.totalorder %s180, %s181
      %p190 = scmp.eq.s32.totalorder %s23, 0
      %p191 = por %p189, %p190
      %p192 = scmp.ne.s32.totalorder %s180, %s181
      %p193 = scmp.eq.s32.totalorder %s24, 3
      %p194 = por %p192, %p193
      %p196 = scmp.ne.s32.totalorder %s181, %s195
      %p197 = scmp.eq.s32.totalorder %s24, 0
      %p198 = por %p196, %p197
      %s200 = sadd.s32 %s199, 1
      %p203 = scmp.eq.s32.totalorder %s18, 3
      %p204 = scmp.ne.s32.totalorder %s199, %s201
      %p205 = scmp.eq.s32.totalorder %s18, 0
      %p206 = por %p204, %p205
      %p207 = scmp.ne.s32.totalorder %s199, %s201
      %p208 = scmp.eq.s32.totalorder %s23, 3
      %p209 = por %p207, %p208
      %p210 = scmp.ne.s32.totalorder %s201, %s202
      %p211 = scmp.eq.s32.totalorder %s23, 0
      %p212 = por %p210, %p211
      %p213 = scmp.ne.s32.totalorder %s201, %s202
      %p214 = scmp.eq.s32.totalorder %s24, 3
      %p215 = por %p213, %p214
      %p217 = scmp.ne.s32.totalorder %s202, %s216
      %p218 = scmp.eq.s32.totalorder %s24, 0
      %p219 = por %p217, %p218
      %s220 = ssub.s32 %s18, %s25
      %p221 = scmp.eq.s32.totalorder %s220, 0
      %s223 = sadd.s32 %s222, 1
      %s224 = scalar_select %p221, %s222, %s223
      %p227 = pneg %p221
      %p228 = scmp.eq.s32.totalorder %s18, 3
      %p229 = por %p227, %p228
      %p230 = scmp.ne.s32.totalorder %s222, %s225
      %p231 = scmp.eq.s32.totalorder %s18, 0
      %p232 = por %p230, %p231
      %p233 = scmp.ne.s32.totalorder %s222, %s225
      %p234 = scmp.eq.s32.totalorder %s23, 3
      %p235 = por %p233, %p234
      %p236 = scmp.ne.s32.totalorder %s225, %s226
      %p237 = scmp.eq.s32.totalorder %s23, 0
      %p238 = por %p236, %p237
      %p239 = scmp.ne.s32.totalorder %s225, %s226
      %p240 = scmp.eq.s32.totalorder %s24, 3
      %p241 = por %p239, %p240
      %p243 = scmp.ne.s32.totalorder %s226, %s242
      %p244 = scmp.eq.s32.totalorder %s24, 0
      %p245 = por %p243, %p244
      %p246 = scmp.le.s32.totalorder 1, %s18
      %p247 = scmp.lt.s32.totalorder %s18, 5
      %p248 = pnand %p246, %p247
      %p249 = pneg %p248
      // Predicated region
      $region9: #{tpu_custom_call.1} parent=5 // pred_check
        _
      $region10: #{tpu_custom_call.1} parent=5 // pred_check_branch
        %251 = sbr.rel (%p248) target = $region12
      $region11: #{tpu_custom_call.1} parent=5 // pred_region
        %s252 = ssub.s32 %s18, 1
        // Predicated region
        $region13: #{tpu_custom_call.1} parent=11 // pred_check
          %p253 = pneg %p65
        $region14: #{tpu_custom_call.1} parent=11 // pred_check_branch
          %255 = sbr.rel (%p253) target = $region16
        $region15: #{tpu_custom_call.1} parent=11 // pred_region
          _
        $region16: #{tpu_custom_call.1} parent=11 // pred_fallthru
          _
        // Predicated region
        $region17: #{tpu_custom_call.1} parent=11 // pred_check
          %p256 = pneg %p86
        $region18: #{tpu_custom_call.1} parent=11 // pred_check_branch
          %258 = sbr.rel (%p256) target = $region20
        $region19: #{tpu_custom_call.1} parent=11 // pred_region
          _
        $region20: #{tpu_custom_call.1} parent=11 // pred_fallthru
          _
        // Predicated region
        $region21: #{tpu_custom_call.1} parent=11 // pred_check
          %p259 = pneg %p107
        $region22: #{tpu_custom_call.1} parent=11 // pred_check_branch
          %261 = sbr.rel (%p259) target = $region24
        $region23: #{tpu_custom_call.1} parent=11 // pred_region
          _
        $region24: #{tpu_custom_call.1} parent=11 // pred_fallthru
          _
        // Predicated region
        $region25: #{tpu_custom_call.1} parent=11 // pred_check
          %p262 = pneg %p128
        $region26: #{tpu_custom_call.1} parent=11 // pred_check_branch
          %264 = sbr.rel (%p262) target = $region28
        $region27: #{tpu_custom_call.1} parent=11 // pred_region
          _
        $region28: #{tpu_custom_call.1} parent=11 // pred_fallthru
          _
        // Predicated region
        $region29: #{tpu_custom_call.1} parent=11 // pred_check
          %p265 = pneg %p149
        $region30: #{tpu_custom_call.1} parent=11 // pred_check_branch
          %267 = sbr.rel (%p265) target = $region32
        $region31: #{tpu_custom_call.1} parent=11 // pred_region
          _
        $region32: #{tpu_custom_call.1} parent=11 // pred_fallthru
          _
        // Predicated region
        $region33: #{tpu_custom_call.1} parent=11 // pred_check
          %p268 = pneg %p170
        $region34: #{tpu_custom_call.1} parent=11 // pred_check_branch
          %270 = sbr.rel (%p268) target = $region36
        $region35: #{tpu_custom_call.1} parent=11 // pred_region
          _
        $region36: #{tpu_custom_call.1} parent=11 // pred_fallthru
          _
        // Predicated region
        $region37: #{tpu_custom_call.1} parent=11 // pred_check
          %p271 = pneg %p191
        $region38: #{tpu_custom_call.1} parent=11 // pred_check_branch
          %273 = sbr.rel (%p271) target = $region40
        $region39: #{tpu_custom_call.1} parent=11 // pred_region
          _
        $region40: #{tpu_custom_call.1} parent=11 // pred_fallthru
          _
        // Predicated region
        $region41: #{tpu_custom_call.1} parent=11 // pred_check
          %p274 = pneg %p212
        $region42: #{tpu_custom_call.1} parent=11 // pred_check_branch
          %276 = sbr.rel (%p274) target = $region44
        $region43: #{tpu_custom_call.1} parent=11 // pred_region
          _
        $region44: #{tpu_custom_call.1} parent=11 // pred_fallthru
          _
      $region12: #{tpu_custom_call.1} parent=5 // pred_fallthru
        _
      %p277 = scmp.lt.s32.totalorder %s18, 4
      // Predicated region
      $region45: #{tpu_custom_call.1} parent=5 // pred_check
        %p278 = pneg %p277
      $region46: #{tpu_custom_call.1} parent=5 // pred_check_branch
        %280 = sbr.rel (%p278) target = $region48
      $region47: #{tpu_custom_call.1} parent=5 // pred_region
        // Predicated region
        $region49: #{tpu_custom_call.1} parent=47 // pred_check
          %p281 = pneg %p38
        $region50: #{tpu_custom_call.1} parent=47 // pred_check_branch
          %283 = sbr.rel (%p281) target = $region52
        $region51: #{tpu_custom_call.1} parent=47 // pred_region
          %s284 = smul.u32 2, %s18
          %p285 = scmp.lt.s32.totalorder %s284, 7
          %s286 = scalar_select %p285, %s284, 7
          %s287 = smul.addr %s286, 2
          %s288 = smul.addr %s287, 4
          %s289 = scalar_lea.vmem %s0, %s288
          %s290 = smul.u32 2, %s18
        $region52: #{tpu_custom_call.1} parent=47 // pred_fallthru
          _
      $region48: #{tpu_custom_call.1} parent=5 // pred_fallthru
        _
      %p291 = scmp.le.s32.totalorder 1, %s18
      %p292 = scmp.lt.s32.totalorder %s18, 5
      %p293 = pnand %p291, %p292
      %p294 = pneg %p293
      // Predicated region
      $region53: #{tpu_custom_call.1} parent=5 // pred_check
        _
      $region54: #{tpu_custom_call.1} parent=5 // pred_check_branch
        %296 = sbr.rel (%p293) target = $region56
      $region55: #{tpu_custom_call.1} parent=5 // pred_region
        %s297 = ssub.s32 %s18, 1
        %s298 = smul.u32 2, %s23
        %p299 = scmp.lt.s32.totalorder %s298, 7
        %s300 = scalar_select %p299, %s298, 7
        %s301 = smul.addr %s300, 2
        %s302 = smul.addr %s301, 4
        %s303 = scalar_lea.vmem %s0, %s302
        %p304 = pneg %p44
        %p305 = pneg %p41
        %p306 = pneg %p65
        %p307 = pneg %p62
        %p308 = pneg %p86
        %p309 = pneg %p83
        %p310 = pneg %p107
        %p311 = pneg %p104
        %p312 = pneg %p128
        %p313 = pneg %p125
        %p314 = pneg %p149
        %p315 = pneg %p146
        %p316 = pneg %p170
        %p317 = pneg %p167
        %p318 = pneg %p191
        %p319 = pneg %p188
        %p320 = pneg %p212
        %p321 = pneg %p209
        %p322 = pneg %p238
        %p323 = pneg %p235
        %s324 = sand.u32 %s225, 1
        %s325 = scalar_lea.sflag [#allocation3], %s324
        %s326 = sand.u32 %s225, 1
        %s327 = smul.addr %s326, 16
        %s328 = scalar_lea.vmem [#allocation2], %s327
        %s329 = smul.u32 2, %s23
        %p330 = scmp.lt.s32.totalorder %s329, 7
        %s331 = scalar_select %p330, %s329, 7
        %s332 = smul.addr %s331, 2
        %s333 = smul.addr %s332, 4
        %s334 = scalar_lea.vmem %s0, %s333
        %s335 = smul.u32 2, %s23
        %s336 = smul.u32 2, %s23
        %v337 = vld [vmem:[%s334] sm:$0xff]
        %v338 = vld [vmem:[%s334 + $0x8] sm:$0xff]
        %v339 = vunpack.c.l.bf16 %v337
        %v340 = vunpack.c.h.bf16 %v337
        %v341 = vunpack.c.l.bf16 %v338
        %v342 = vunpack.c.h.bf16 %v338
        %v343 = vld [vmem:[%s1] sm:$0xff]
        %v344 = vld [vmem:[%s1 + $0x8] sm:$0xff]
        %v345 = vld [vmem:[%s1 + $0x10] sm:$0xff]
        %v346 = vld [vmem:[%s1 + $0x18] sm:$0xff]
        %v347 = vld [vmem:[%s1 + $0x20] sm:$0xff]
        %v348 = vld [vmem:[%s1 + $0x28] sm:$0xff]
        %v349 = vld [vmem:[%s1 + $0x30] sm:$0xff]
        %v350 = vld [vmem:[%s1 + $0x38] sm:$0xff]
        %v351 = vld [vmem:[%s1 + $0x40] sm:$0xff]
        %v352 = vld [vmem:[%s1 + $0x48] sm:$0xff]
        %v353 = vld [vmem:[%s1 + $0x50] sm:$0xff]
        %v354 = vld [vmem:[%s1 + $0x58] sm:$0xff]
        %v355 = vld [vmem:[%s1 + $0x60] sm:$0xff]
        %v356 = vld [vmem:[%s1 + $0x68] sm:$0xff]
        %v357 = vld [vmem:[%s1 + $0x70] sm:$0xff]
        %v358 = vld [vmem:[%s1 + $0x78] sm:$0xff]
        %v359 = vld [vmem:[%s1 + $0x80] sm:$0xff]
        %v360 = vld [vmem:[%s1 + $0x88] sm:$0xff]
        %v361 = vld [vmem:[%s1 + $0x90] sm:$0xff]
        %v362 = vld [vmem:[%s1 + $0x98] sm:$0xff]
        %v363 = vld [vmem:[%s1 + $0xa0] sm:$0xff]
        %v364 = vld [vmem:[%s1 + $0xa8] sm:$0xff]
        %v365 = vld [vmem:[%s1 + $0xb0] sm:$0xff]
        %v366 = vld [vmem:[%s1 + $0xb8] sm:$0xff]
        %v367 = vld [vmem:[%s1 + $0xc0] sm:$0xff]
        %v368 = vld [vmem:[%s2] sm:$0x1]
        %v370 = vlaneseq
        %v371 = vshrl.u32 %v370, 7
        %v372 = vsub.s32 0, %v371
        %v373 = vrot.slane %v368, %v372
        %vm375 = vcmask 588800
        %v377 = vsel %vm375, %v340, 0
        %v380 = vsel %vm375, %v342, 0
        %382 = vmatprep.subr.mxu0 0.0
        %383 = vmatpush1.msra.mxu0 %v358
        %384 = vmatprep.subr.mxu0 0.0
        %385 = vmatpush1.msra.mxu0 %v357
        %386 = vmatprep.subr.mxu0 0.0
        %387 = vmatpush1.msra.mxu0 %v356
        %388 = vmatprep.subr.mxu0 0.0
        %389 = vmatpush1.msra.mxu0 %v355
        %390 = vmatprep.subr.mxu0 0.0
        %391 = vmatpush1.msra.mxu0 %v354
        %392 = vmatprep.subr.mxu0 0.0
        %393 = vmatpush1.msra.mxu0 %v353
        %394 = vmatprep.subr.mxu0 0.0
        %395 = vmatpush1.msra.mxu0 %v352
        %396 = vmatprep.subr.mxu0 0.0
        %397 = vmatpush1.msra.mxu0 %v351
        %398 = vmatprep.subr.mxu0 0.0
        %399 = vmatpush1.msra.mxu0 %v350
        %400 = vmatprep.subr.mxu0 0.0
        %401 = vmatpush1.msra.mxu0 %v349
        %402 = vmatprep.subr.mxu0 0.0
        %403 = vmatpush1.msra.mxu0 %v348
        %404 = vmatprep.subr.mxu0 0.0
        %405 = vmatpush1.msra.mxu0 %v347
        %406 = vmatprep.subr.mxu0 0.0
        %407 = vmatpush1.msra.mxu0 %v346
        %408 = vmatprep.subr.mxu0 0.0
        %409 = vmatpush1.msra.mxu0 %v345
        %410 = vmatprep.subr.mxu0 0.0
        %411 = vmatpush1.msra.mxu0 %v344
        %412 = vmatprep.subr.mxu0 0.0
        %413 = vmatpush1.msra.mxu0 %v343
        %414 = vmatprep.subr.mxu0 0.0
        %415 = vmatpush2.msra.mxu0 0.0
        %416 = vmatprep.subr.mxu0 0.0
        %417 = vmatpush2.msra.mxu0 0.0
        %418 = vmatprep.subr.mxu0 0.0
        %419 = vmatpush2.msra.mxu0 0.0
        %420 = vmatprep.subr.mxu0 0.0
        %421 = vmatpush2.msra.mxu0 0.0
        %422 = vmatprep.subr.mxu0 0.0
        %423 = vmatpush2.msra.mxu0 0.0
        %424 = vmatprep.subr.mxu0 0.0
        %425 = vmatpush2.msra.mxu0 0.0
        %426 = vmatprep.subr.mxu0 0.0
        %427 = vmatpush2.msra.mxu0 0.0
        %428 = vmatprep.subr.mxu0 0.0
        %429 = vmatpush2.msra.mxu0 %v367
        %430 = vmatprep.subr.mxu0 0.0
        %431 = vmatpush2.msra.mxu0 %v366
        %432 = vmatprep.subr.mxu0 0.0
        %433 = vmatpush2.msra.mxu0 %v365
        %434 = vmatprep.subr.mxu0 0.0
        %435 = vmatpush2.msra.mxu0 %v364
        %436 = vmatprep.subr.mxu0 0.0
        %437 = vmatpush2.msra.mxu0 %v363
        %438 = vmatprep.subr.mxu0 0.0
        %439 = vmatpush2.msra.mxu0 %v362
        %440 = vmatprep.subr.mxu0 0.0
        %441 = vmatpush2.msra.mxu0 %v361
        %442 = vmatprep.subr.mxu0 0.0
        %443 = vmatpush2.msra.mxu0 %v360
        %444 = vmatprep.subr.mxu0 0.0
        %445 = vmatpush2.msra.mxu0 %v359
        %446 = vmatprep.mubr.f32.mxu0 %v377
        %447 = vmatmul.mubr.f32.gmra.mxu0 %v339
        %v448 = vpop.f32.mrf.mxu0
        %v449 = vadd.f32 %v373, %v448
        %v450 = vpop.f32.mrf.mxu0
        %451 = vmatprep.mubr.f32.mxu0 %v380
        %452 = vmatmul.mubr.f32.gmra.mxu0 %v341
        %v453 = vpop.f32.mrf.mxu0
        %v454 = vadd.f32 %v373, %v453
        %v455 = vpop.f32.mrf.mxu0
        %456 = vdwg.mxu0
        %v457 = vxor.u32 %v449, 2147483648
        %v458 = vxor.u32 %v454, 2147483648
        %v459 = vmul.f32 %v457, 1.442695
        %v460 = vpow.pop %v459
        %v461 = vmul.f32 %v458, 1.442695
        %v462 = vpow.pop %v461
        %v463 = vadd.f32 %v460, 1.0
        %v464 = vadd.f32 %v462, 1.0
        %v465 = vrcp.pop %v463
        %v466 = vmul.f32 1.0, %v465
        %v467 = vrcp.pop %v464
        %v468 = vmul.f32 1.0, %v467
        %v469 = vld [vmem:[%s3] sm:$0xff]
        %v470 = vld [vmem:[%s3 + $0x8] sm:$0xff]
        %v471 = vld [vmem:[%s3 + $0x10] sm:$0xf]
        %v472 = vld [vmem:[%s4] sm:$0x1]
        %v474 = vlaneseq
        %v475 = vshrl.u32 %v474, 7
        %v476 = vsub.s32 0, %v475
        %v477 = vrot.slane %v472, %v476
        %vm479 = vcmask 162816
        %v481 = vsel %vm479, %v466, 0
        %v484 = vsel %vm479, %v468, 0
        %vm486 = vcmask 1043456
        %v488 = vsel %vm486, %v471, 0
        %490 = vmatprep.subr.mxu0 0.0
        %491 = vmatpush1.msra.mxu0 0.0
        %492 = vmatprep.subr.mxu0 0.0
        %493 = vmatpush1.msra.mxu0 0.0
        %494 = vmatprep.subr.mxu0 0.0
        %495 = vmatpush1.msra.mxu0 0.0
        %496 = vmatprep.subr.mxu0 0.0
        %497 = vmatpush1.msra.mxu0 0.0
        %498 = vmatprep.subr.mxu0 0.0
        %499 = vmatpush1.msra.mxu0 0.0
        %500 = vmatprep.subr.mxu0 0.0
        %501 = vmatpush1.msra.mxu0 0.0
        %502 = vmatprep.subr.mxu0 0.0
        %503 = vmatpush1.msra.mxu0 0.0
        %504 = vmatprep.subr.mxu0 0.0
        %505 = vmatpush1.msra.mxu0 0.0
        %506 = vmatprep.subr.mxu0 0.0
        %507 = vmatpush1.msra.mxu0 0.0
        %508 = vmatprep.subr.mxu0 0.0
        %509 = vmatpush1.msra.mxu0 0.0
        %510 = vmatprep.subr.mxu0 0.0
        %511 = vmatpush1.msra.mxu0 0.0
        %512 = vmatprep.subr.mxu0 0.0
        %513 = vmatpush1.msra.mxu0 0.0
        %514 = vmatprep.subr.mxu0 0.0
        %515 = vmatpush1.msra.mxu0 0.0
        %516 = vmatprep.subr.mxu0 0.0
        %517 = vmatpush1.msra.mxu0 %v488
        %518 = vmatprep.subr.mxu0 0.0
        %519 = vmatpush1.msra.mxu0 %v470
        %520 = vmatprep.subr.mxu0 0.0
        %521 = vmatpush1.msra.mxu0 %v469
        %522 = vmatprep.subr.mxu0 0.0
        %523 = vmatpush2.msra.mxu0 0.0
        %524 = vmatprep.subr.mxu0 0.0
        %525 = vmatpush2.msra.mxu0 0.0
        %526 = vmatprep.subr.mxu0 0.0
        %527 = vmatpush2.msra.mxu0 0.0
        %528 = vmatprep.subr.mxu0 0.0
        %529 = vmatpush2.msra.mxu0 0.0
        %530 = vmatprep.subr.mxu0 0.0
        %531 = vmatpush2.msra.mxu0 0.0
        %532 = vmatprep.subr.mxu0 0.0
        %533 = vmatpush2.msra.mxu0 0.0
        %534 = vmatprep.subr.mxu0 0.0
        %535 = vmatpush2.msra.mxu0 0.0
        %536 = vmatprep.subr.mxu0 0.0
        %537 = vmatpush2.msra.mxu0 0.0
        %538 = vmatprep.subr.mxu0 0.0
        %539 = vmatpush2.msra.mxu0 0.0
        %540 = vmatprep.subr.mxu0 0.0
        %541 = vmatpush2.msra.mxu0 0.0
        %542 = vmatprep.subr.mxu0 0.0
        %543 = vmatpush2.msra.mxu0 0.0
        %544 = vmatprep.subr.mxu0 0.0
        %545 = vmatpush2.msra.mxu0 0.0
        %546 = vmatprep.subr.mxu0 0.0
        %547 = vmatpush2.msra.mxu0 0.0
        %548 = vmatprep.subr.mxu0 0.0
        %549 = vmatpush2.msra.mxu0 0.0
        %550 = vmatprep.subr.mxu0 0.0
        %551 = vmatpush2.msra.mxu0 0.0
        %552 = vmatprep.subr.mxu0 0.0
        %553 = vmatpush2.msra.mxu0 0.0
        %554 = vmatprep.mubr.f32.mxu0 0.0
        %555 = vmatmul.mubr.f32.gmra.mxu0 %v481
        %v556 = vpop.f32.mrf.mxu0
        %v557 = vadd.f32 %v477, %v556
        %v558 = vpop.f32.mrf.mxu0
        %559 = vmatprep.mubr.f32.mxu0 0.0
        %560 = vmatmul.mubr.f32.gmra.mxu0 %v484
        %v561 = vpop.f32.mrf.mxu0
        %v562 = vadd.f32 %v477, %v561
        %v563 = vpop.f32.mrf.mxu0
        %564 = vdwg.mxu0
        %v565 = vxor.u32 %v557, 2147483648
        %v566 = vxor.u32 %v562, 2147483648
        %v567 = vmul.f32 %v565, 1.442695
        %v568 = vpow.pop %v567
        %v569 = vmul.f32 %v566, 1.442695
        %v570 = vpow.pop %v569
        %v571 = vadd.f32 %v568, 1.0
        %v572 = vadd.f32 %v570, 1.0
        %v573 = vrcp.pop %v571
        %v574 = vmul.f32 1.0, %v573
        %v575 = vrcp.pop %v572
        %v576 = vmul.f32 1.0, %v575
        %v577 = vld [vmem:[%s5] sm:$0xff]
        %v578 = vld [vmem:[%s5 + $0x8] sm:$0x3]
        %v579 = vld [vmem:[%s6] sm:$0x1]
        %v581 = vlaneseq
        %v582 = vshrl.u32 %v581, 7
        %v583 = vsub.s32 0, %v582
        %v584 = vrot.slane %v579, %v583
        %vm586 = vcmask 80896
        %v588 = vsel %vm586, %v574, 0
        %v591 = vsel %vm586, %v576, 0
        %vm593 = vcmask 1041408
        %v595 = vsel %vm593, %v578, 0
        %597 = vmatprep.subr.mxu0 0.0
        %598 = vmatpush1.msra.mxu0 0.0
        %599 = vmatprep.subr.mxu0 0.0
        %600 = vmatpush1.msra.mxu0 0.0
        %601 = vmatprep.subr.mxu0 0.0
        %602 = vmatpush1.msra.mxu0 0.0
        %603 = vmatprep.subr.mxu0 0.0
        %604 = vmatpush1.msra.mxu0 0.0
        %605 = vmatprep.subr.mxu0 0.0
        %606 = vmatpush1.msra.mxu0 0.0
        %607 = vmatprep.subr.mxu0 0.0
        %608 = vmatpush1.msra.mxu0 0.0
        %609 = vmatprep.subr.mxu0 0.0
        %610 = vmatpush1.msra.mxu0 0.0
        %611 = vmatprep.subr.mxu0 0.0
        %612 = vmatpush1.msra.mxu0 0.0
        %613 = vmatprep.subr.mxu0 0.0
        %614 = vmatpush1.msra.mxu0 0.0
        %615 = vmatprep.subr.mxu0 0.0
        %616 = vmatpush1.msra.mxu0 0.0
        %617 = vmatprep.subr.mxu0 0.0
        %618 = vmatpush1.msra.mxu0 0.0
        %619 = vmatprep.subr.mxu0 0.0
        %620 = vmatpush1.msra.mxu0 0.0
        %621 = vmatprep.subr.mxu0 0.0
        %622 = vmatpush1.msra.mxu0 0.0
        %623 = vmatprep.subr.mxu0 0.0
        %624 = vmatpush1.msra.mxu0 0.0
        %625 = vmatprep.subr.mxu0 0.0
        %626 = vmatpush1.msra.mxu0 %v595
        %627 = vmatprep.subr.mxu0 0.0
        %628 = vmatpush1.msra.mxu0 %v577
        %629 = vmatprep.subr.mxu0 0.0
        %630 = vmatpush2.msra.mxu0 0.0
        %631 = vmatprep.subr.mxu0 0.0
        %632 = vmatpush2.msra.mxu0 0.0
        %633 = vmatprep.subr.mxu0 0.0
        %634 = vmatpush2.msra.mxu0 0.0
        %635 = vmatprep.subr.mxu0 0.0
        %636 = vmatpush2.msra.mxu0 0.0
        %637 = vmatprep.subr.mxu0 0.0
        %638 = vmatpush2.msra.mxu0 0.0
        %639 = vmatprep.subr.mxu0 0.0
        %640 = vmatpush2.msra.mxu0 0.0
        %641 = vmatprep.subr.mxu0 0.0
        %642 = vmatpush2.msra.mxu0 0.0
        %643 = vmatprep.subr.mxu0 0.0
        %644 = vmatpush2.msra.mxu0 0.0
        %645 = vmatprep.subr.mxu0 0.0
        %646 = vmatpush2.msra.mxu0 0.0
        %647 = vmatprep.subr.mxu0 0.0
        %648 = vmatpush2.msra.mxu0 0.0
        %649 = vmatprep.subr.mxu0 0.0
        %650 = vmatpush2.msra.mxu0 0.0
        %651 = vmatprep.subr.mxu0 0.0
        %652 = vmatpush2.msra.mxu0 0.0
        %653 = vmatprep.subr.mxu0 0.0
        %654 = vmatpush2.msra.mxu0 0.0
        %655 = vmatprep.subr.mxu0 0.0
        %656 = vmatpush2.msra.mxu0 0.0
        %657 = vmatprep.subr.mxu0 0.0
        %658 = vmatpush2.msra.mxu0 0.0
        %659 = vmatprep.subr.mxu0 0.0
        %660 = vmatpush2.msra.mxu0 0.0
        %661 = vmatprep.mubr.f32.mxu0 0.0
        %662 = vmatmul.mubr.f32.gmra.mxu0 %v588
        %v663 = vpop.f32.mrf.mxu0
        %v664 = vadd.f32 %v584, %v663
        %v665 = vpop.f32.mrf.mxu0
        %666 = vmatprep.mubr.f32.mxu0 0.0
        %667 = vmatmul.mubr.f32.gmra.mxu0 %v591
        %v668 = vpop.f32.mrf.mxu0
        %v669 = vadd.f32 %v584, %v668
        %v670 = vpop.f32.mrf.mxu0
        %671 = vdwg.mxu0
        %v672 = vxor.u32 %v664, 2147483648
        %v673 = vxor.u32 %v669, 2147483648
        %v674 = vmul.f32 %v672, 1.442695
        %v675 = vpow.pop %v674
        %v676 = vmul.f32 %v673, 1.442695
        %v677 = vpow.pop %v676
        %v678 = vadd.f32 %v675, 1.0
        %v679 = vadd.f32 %v677, 1.0
        %v680 = vrcp.pop %v678
        %v681 = vmul.f32 1.0, %v680
        %v682 = vrcp.pop %v679
        %v683 = vmul.f32 1.0, %v682
        %v684 = vld [vmem:[%s7] sm:$0xff]
        %v685 = vld [vmem:[%s7 + $0x8] sm:$0xff]
        %v686 = vld [vmem:[%s7 + $0x10] sm:$0xff]
        %v687 = vld [vmem:[%s7 + $0x18] sm:$0xff]
        %v688 = vld [vmem:[%s7 + $0x20] sm:$0xf]
        %v689 = vld [vmem:[%s7 + $0x28] sm:$0xf]
        %v690 = vld [vmem:[%s8] sm:$0x3]
        %v692 = vlaneseq
        %v693 = vshrl.u32 %v692, 7
        %v694 = vsub.s32 0, %v693
        %v695 = vrot.slane %v690, %v694
        %v696 = vlaneseq
        %v697 = vshrl.u32 %v696, 7
        %v698 = vsub.s32 1, %v697
        %v699 = vrot.slane %v690, %v698
        %v703 = vsel %vm479, %v681, 0
        %v706 = vsel %vm479, %v683, 0
        %v709 = vsel %vm486, %v688, 0
        %v712 = vsel %vm486, %v689, 0
        %714 = vmatprep.subr.mxu0 0.0
        %715 = vmatpush1.msra.mxu0 0.0
        %716 = vmatprep.subr.mxu0 0.0
        %717 = vmatpush1.msra.mxu0 0.0
        %718 = vmatprep.subr.mxu0 0.0
        %719 = vmatpush1.msra.mxu0 0.0
        %720 = vmatprep.subr.mxu0 0.0
        %721 = vmatpush1.msra.mxu0 0.0
        %722 = vmatprep.subr.mxu0 0.0
        %723 = vmatpush1.msra.mxu0 0.0
        %724 = vmatprep.subr.mxu0 0.0
        %725 = vmatpush1.msra.mxu0 0.0
        %726 = vmatprep.subr.mxu0 0.0
        %727 = vmatpush1.msra.mxu0 0.0
        %728 = vmatprep.subr.mxu0 0.0
        %729 = vmatpush1.msra.mxu0 0.0
        %730 = vmatprep.subr.mxu0 0.0
        %731 = vmatpush1.msra.mxu0 0.0
        %732 = vmatprep.subr.mxu0 0.0
        %733 = vmatpush1.msra.mxu0 0.0
        %734 = vmatprep.subr.mxu0 0.0
        %735 = vmatpush1.msra.mxu0 0.0
        %736 = vmatprep.subr.mxu0 0.0
        %737 = vmatpush1.msra.mxu0 0.0
        %738 = vmatprep.subr.mxu0 0.0
        %739 = vmatpush1.msra.mxu0 0.0
        %740 = vmatprep.subr.mxu0 %v712
        %741 = vmatpush1.msra.mxu0 %v709
        %742 = vmatprep.subr.mxu0 %v687
        %743 = vmatpush1.msra.mxu0 %v686
        %744 = vmatprep.subr.mxu0 %v685
        %745 = vmatpush1.msra.mxu0 %v684
        %746 = vmatprep.subr.mxu0 0.0
        %747 = vmatpush2.msra.mxu0 0.0
        %748 = vmatprep.subr.mxu0 0.0
        %749 = vmatpush2.msra.mxu0 0.0
        %750 = vmatprep.subr.mxu0 0.0
        %751 = vmatpush2.msra.mxu0 0.0
        %752 = vmatprep.subr.mxu0 0.0
        %753 = vmatpush2.msra.mxu0 0.0
        %754 = vmatprep.subr.mxu0 0.0
        %755 = vmatpush2.msra.mxu0 0.0
        %756 = vmatprep.subr.mxu0 0.0
        %757 = vmatpush2.msra.mxu0 0.0
        %758 = vmatprep.subr.mxu0 0.0
        %759 = vmatpush2.msra.mxu0 0.0
        %760 = vmatprep.subr.mxu0 0.0
        %761 = vmatpush2.msra.mxu0 0.0
        %762 = vmatprep.subr.mxu0 0.0
        %763 = vmatpush2.msra.mxu0 0.0
        %764 = vmatprep.subr.mxu0 0.0
        %765 = vmatpush2.msra.mxu0 0.0
        %766 = vmatprep.subr.mxu0 0.0
        %767 = vmatpush2.msra.mxu0 0.0
        %768 = vmatprep.subr.mxu0 0.0
        %769 = vmatpush2.msra.mxu0 0.0
        %770 = vmatprep.subr.mxu0 0.0
        %771 = vmatpush2.msra.mxu0 0.0
        %772 = vmatprep.subr.mxu0 0.0
        %773 = vmatpush2.msra.mxu0 0.0
        %774 = vmatprep.subr.mxu0 0.0
        %775 = vmatpush2.msra.mxu0 0.0
        %776 = vmatprep.subr.mxu0 0.0
        %777 = vmatpush2.msra.mxu0 0.0
        %778 = vmatprep.mubr.f32.mxu0 0.0
        %779 = vmatmul.mubr.f32.gmra.mxu0 %v703
        %v780 = vpop.f32.mrf.mxu0
        %v781 = vadd.f32 %v695, %v780
        %v782 = vpop.f32.mrf.mxu0
        %v783 = vadd.f32 %v699, %v782
        %784 = vmatprep.mubr.f32.mxu0 0.0
        %785 = vmatmul.mubr.f32.gmra.mxu0 %v706
        %v786 = vpop.f32.mrf.mxu0
        %v787 = vadd.f32 %v695, %v786
        %v788 = vpop.f32.mrf.mxu0
        %v789 = vadd.f32 %v699, %v788
        %790 = vdwg.mxu0
        %v791 = vpack.c.bf16 %v787, %v781
        %v792 = vpack.c.bf16 %v789, %v783
        %v795 = vunpack.c.l.b16 %v791
        %v796 = vunpack.c.l.b16 %v792
        %v797 = vunpack.c.h.b16 %v791
        %v798 = vunpack.c.h.b16 %v792
        %v799 = vpack.c.b16 %v796, %v795
        %v800 = vpack.c.b16 %v798, %v797
        %vm803 = vcmask 588804
        %vm804 = vmor %vm803, %vm486
        %805 = vst.msk [vmem:[%s328] sm:$0xff] %vm804, %v799
        %806 = vst.msk [vmem:[%s328 + $0x8] sm:$0xff] %vm804, %v800
        %s807 = sand.u32 %s225, 1
        %s808 = scalar_lea.sflag [#allocation3], %s807
        %s809 = sand.u32 %s225, 1
        %s810 = smul.addr %s809, 16
        %s811 = scalar_lea.vmem [#allocation2], %s810
        // Predicated region
        $region57: #{tpu_custom_call.1} parent=55 // pred_check
          %p812 = pneg %p235
        $region58: #{tpu_custom_call.1} parent=55 // pred_check_branch
          %814 = sbr.rel (%p812) target = $region60
        $region59: #{tpu_custom_call.1} parent=55 // pred_region
          %s815 = smul.u32 2, %s23
          %s817 = ssub.s32 256, 256
          %818 = vsyncadd %s808, %s817
          %s819 = smul.addr %s815, 2
          %s820 = smul.addr %s819, 64
          %s821 = scalar_lea.hbm %s9, %s820
          %s822 = sshll.u32 %s811, 4
          %s823 = int_to_ptr.vmem [resolvable:$true] %s822
          %828 = dma.vmem_to_hbm [thread:$0]  %s823, 256, %s821, %s808, 128, 128, 8
        $region60: #{tpu_custom_call.1} parent=55 // pred_fallthru
          _
      $region56: #{tpu_custom_call.1} parent=5 // pred_fallthru
        _
      %p829 = scmp.le.s32.totalorder 2, %s18
      // Predicated region
      $region61: #{tpu_custom_call.1} parent=5 // pred_check
        %p830 = pneg %p829
      $region62: #{tpu_custom_call.1} parent=5 // pred_check_branch
        %832 = sbr.rel (%p830) target = $region64
      $region63: #{tpu_custom_call.1} parent=5 // pred_region
        %s833 = ssub.s32 %s18, 2
        // Predicated region
        $region65: #{tpu_custom_call.1} parent=63 // pred_check
          %p834 = pneg %p241
        $region66: #{tpu_custom_call.1} parent=63 // pred_check_branch
          %836 = sbr.rel (%p834) target = $region68
        $region67: #{tpu_custom_call.1} parent=63 // pred_region
          %s837 = sand.u32 %s226, 1
          %s838 = scalar_lea.sflag [#allocation3], %s837
          %s839 = sand.u32 %s226, 1
          %s840 = smul.addr %s839, 16
          %s841 = scalar_lea.vmem [#allocation2], %s840
          %842 = dma.done %s838, 256
        $region68: #{tpu_custom_call.1} parent=63 // pred_fallthru
          _
      $region64: #{tpu_custom_call.1} parent=5 // pred_fallthru
        _
    $region6: #{tpu_custom_call.1} parent=1 // loop_footer
      %s22 = sadd.s32 1, %s18
    $region7: #{tpu_custom_call.1} parent=1 // loop_footer_branch
      %17 = sbr.rel target = $region3
    $region8: #{tpu_custom_call.1} parent=1 // loop_exit
      _
    %843 = vsyncpa [#allocation3], 1
    %s844 = scalar_lea.sflag [#allocation3], 1
    %845 = vsyncpa %s844, 1

</llo_original>
